<compile_context>
chip_gen: v7x
topology: tpu7x:2x2x1
jax: 0.10.0
libtpu: 0.0.40
codegen_flags: <defaults>
</compile_context>

<pallas_src>
import math
import functools

import jax
import jax.numpy as jnp
from jax.experimental import pallas as pl
from jax.experimental.pallas import tpu as pltpu


def _round_up(x: int, m: int) -> int:
    return (x + m - 1) // m * m


def token_emb_kernel(ids_ref, table_ref, out_ref, gather_buf, sem, *, scale, tpt):
    """One grid step: gather `tpt` table rows and write the scaled tile.

    ids_ref   : (n_pad,) int32 in SMEM (scalar prefetch)
    table_ref : (V, E)   in HBM (pl.ANY) -- manual DMA source
    out_ref   : (tpt, E) output tile (VMEM, pipelined by BlockSpec)
    gather_buf: (tpt, E) VMEM scratch
    sem       : (1,)     DMA semaphore
    """
    i = pl.program_id(0)
    base = i * tpt

    # Issue all row gathers for this tile; they run concurrently and all
    # signal the same DMA semaphore.
    @pl.loop(0, tpt)
    def _issue(t):
        row = ids_ref[base + t]
        pltpu.make_async_copy(table_ref.at[row], gather_buf.at[t], sem.at[0]).start()

    # Wait for every row copy (each wait consumes one row's worth of bytes;
    # the src here is only a same-shape descriptor, as in the paged-attn idiom).
    @pl.loop(0, tpt)
    def _wait(t):
        pltpu.make_async_copy(table_ref.at[0], gather_buf.at[t], sem.at[0]).wait()

    out_ref[...] = (gather_buf[...] * scale).astype(out_ref.dtype)


def token_embedding(tokens, table, *, tile=256):
    """tokens: (B, S) int, table: (V, E) f32 -> (B, S, E) f32 (= emb * sqrt(E))."""
    B, S = tokens.shape
    V, E = table.shape
    N = B * S
    scale = float(math.sqrt(E))
    itemsize = jnp.dtype(table.dtype).itemsize

    # Effective tile: multiple of 8 (sublanes), no larger than needed.
    tile_eff = _round_up(min(tile, _round_up(N, 8)), 8)
    n_pad = _round_up(N, tile_eff)
    nt = n_pad // tile_eff

    ids = jnp.clip(tokens.reshape(-1).astype(jnp.int32), 0, V - 1)
    if n_pad != N:
        ids = jnp.pad(ids, (0, n_pad - N))  # pad with token 0 (valid row)

    kernel = functools.partial(token_emb_kernel, scale=scale, tpt=tile_eff)

    out = pl.pallas_call(
        kernel,
        out_shape=jax.ShapeDtypeStruct((n_pad, E), table.dtype),
        grid_spec=pltpu.PrefetchScalarGridSpec(
            num_scalar_prefetch=1,                      # ids -> SMEM
            grid=(nt,),
            in_specs=[
                pl.BlockSpec(memory_space=pl.ANY),      # full table stays in HBM
            ],
            out_specs=pl.BlockSpec((tile_eff, E), lambda i, ids: (i, 0)),
            scratch_shapes=[
                pltpu.VMEM((tile_eff, E), table.dtype),  # gather buffer
                pltpu.SemaphoreType.DMA((1,)),
            ],
        ),
        compiler_params=pltpu.CompilerParams(
            dimension_semantics=("parallel",),           # token tiles independent
            vmem_limit_bytes=32 * 1024 * 1024,
        ),
        cost_estimate=pl.CostEstimate(
            flops=N * E,                                  # the sqrt(E) scale
            transcendentals=0,
            bytes_accessed=2 * n_pad * E * itemsize + 4 * n_pad,
        ),
    )(ids, table)

    return out[:N].reshape(B, S, E)


if __name__ == "__main__":
    vocab_size = 64
    emb_size = 128

    key = jax.random.PRNGKey(0)
    k_tab, k_tok1, k_tok2 = jax.random.split(key, 3)

    # nn.Embedding default init: weight ~ N(0, 1).
    table = jax.random.normal(k_tab, (vocab_size, emb_size), dtype=jnp.float32)

    # Case 1: small, tile == full token count.
    B, S = 2, 8
    tokens = jax.random.randint(k_tok1, (B, S), 0, vocab_size, dtype=jnp.int32)
    out = jax.block_until_ready(token_embedding(tokens, table))
    ref = jnp.take(table, tokens, axis=0) * math.sqrt(emb_size)
    assert out.shape == (B, S, emb_size)
    assert jnp.allclose(out, ref, atol=1e-5, rtol=1e-5)

    # Case 2: token count not a tile multiple -> exercises padding + multi-tile grid.
    B2, S2 = 2, 40
    tokens2 = jax.random.randint(k_tok2, (B2, S2), 0, vocab_size, dtype=jnp.int32)
    out2 = jax.block_until_ready(token_embedding(tokens2, table, tile=32))
    ref2 = jnp.take(table, tokens2, axis=0) * math.sqrt(emb_size)
    assert out2.shape == (B2, S2, emb_size)
    assert jnp.allclose(out2, ref2, atol=1e-5, rtol=1e-5)

    print("KERNEL_OK")
</pallas_src>

<mosaic_0001>
module attributes {stable_mosaic.version = 11 : i64} {
  func.func @token_emb_kernel(%arg0: i32, %arg1: memref<16xi32, #tpu.memory_space<smem>>, %arg2: memref<64x128xf32, #tpu.memory_space<any>>, %arg3: memref<16x128xf32, #tpu.memory_space<vmem>>, %arg4: memref<16x128xf32, #tpu.memory_space<vmem>>, %arg5: memref<1x!tpu.dma_semaphore, #tpu.memory_space<semaphore_mem>>) attributes {dimension_semantics = [#tpu.dimension_semantics<parallel>], iteration_bounds = array<i64: 1>, scalar_prefetch = 1 : i64, scratch_operands = 2 : i64, tpu.core_type = #tpu.core_type<tc>, window_params = [{}, {transform_indices = @transform_1, window_bounds = array<i64: 16, 128>}]} {
    %c16_i32 = arith.constant 16 : i32
    %0 = arith.muli %arg0, %c16_i32 : i32
    %c0_i32 = arith.constant 0 : i32
    %c16_i32_0 = arith.constant 16 : i32
    %1 = arith.addi %c0_i32, %c16_i32_0 : i32
    %c1_i32 = arith.constant 1 : i32
    scf.for %arg6 = %c0_i32 to %1 step %c1_i32  : i32 {
      %c1_i32_9 = arith.constant 1 : i32
      %7 = arith.muli %arg6, %c1_i32_9 : i32
      %c0_i32_10 = arith.constant 0 : i32
      %8 = arith.addi %c0_i32_10, %7 : i32
      %9 = arith.addi %0, %8 : i32
      %10 = arith.index_cast %9 : i32 to index
      %11 = memref.load %arg1[%10] : memref<16xi32, #tpu.memory_space<smem>>
      %c0_i32_11 = arith.constant 0 : i32
      %c0_i32_12 = arith.constant 0 : i32
      %12 = tpu.memref_slice %arg2[%11, %c0_i32_12] : memref<64x128xf32, #tpu.memory_space<any>> -> memref<1x128xf32, #tpu.memory_space<any>>
      %13 = tpu.memref_squeeze %12 : memref<1x128xf32, #tpu.memory_space<any>> -> memref<128xf32, #tpu.memory_space<any>>
      %c0_i32_13 = arith.constant 0 : i32
      %14 = tpu.memref_slice %arg4[%8, %c0_i32_13] : memref<16x128xf32, #tpu.memory_space<vmem>> -> memref<1x128xf32, #tpu.memory_space<vmem>>
      %15 = tpu.memref_squeeze %14 : memref<1x128xf32, #tpu.memory_space<vmem>> -> memref<128xf32, #tpu.memory_space<vmem>>
      %16 = tpu.memref_slice %arg5[%c0_i32_11] : memref<1x!tpu.dma_semaphore, #tpu.memory_space<semaphore_mem>> -> memref<1x!tpu.dma_semaphore, #tpu.memory_space<semaphore_mem>>
      %17 = tpu.memref_squeeze %16 : memref<1x!tpu.dma_semaphore, #tpu.memory_space<semaphore_mem>> -> memref<!tpu.dma_semaphore, #tpu.memory_space<semaphore_mem>>
      tpu.enqueue_dma source(%13 : memref<128xf32, #tpu.memory_space<any>>) target(%15 : memref<128xf32, #tpu.memory_space<vmem>>) target_semaphore(%17 : memref<!tpu.dma_semaphore, #tpu.memory_space<semaphore_mem>>)
    }
    %c16_i32_1 = arith.constant 16 : i32
    %c0_i32_2 = arith.constant 0 : i32
    %c16_i32_3 = arith.constant 16 : i32
    %2 = arith.addi %c0_i32_2, %c16_i32_3 : i32
    %c1_i32_4 = arith.constant 1 : i32
    scf.for %arg6 = %c0_i32_2 to %2 step %c1_i32_4  : i32 {
      %c1_i32_9 = arith.constant 1 : i32
      %7 = arith.muli %arg6, %c1_i32_9 : i32
      %c0_i32_10 = arith.constant 0 : i32
      %8 = arith.addi %c0_i32_10, %7 : i32
      %c0_i32_11 = arith.constant 0 : i32
      %c0_i32_12 = arith.constant 0 : i32
      %c0_i32_13 = arith.constant 0 : i32
      %9 = tpu.memref_slice %arg2[%c0_i32_11, %c0_i32_13] : memref<64x128xf32, #tpu.memory_space<any>> -> memref<1x128xf32, #tpu.memory_space<any>>
      %10 = tpu.memref_squeeze %9 : memref<1x128xf32, #tpu.memory_space<any>> -> memref<128xf32, #tpu.memory_space<any>>
      %c0_i32_14 = arith.constant 0 : i32
      %11 = tpu.memref_slice %arg4[%8, %c0_i32_14] : memref<16x128xf32, #tpu.memory_space<vmem>> -> memref<1x128xf32, #tpu.memory_space<vmem>>
      %12 = tpu.memref_squeeze %11 : memref<1x128xf32, #tpu.memory_space<vmem>> -> memref<128xf32, #tpu.memory_space<vmem>>
      %13 = tpu.memref_slice %arg5[%c0_i32_12] : memref<1x!tpu.dma_semaphore, #tpu.memory_space<semaphore_mem>> -> memref<1x!tpu.dma_semaphore, #tpu.memory_space<semaphore_mem>>
      %14 = tpu.memref_squeeze %13 : memref<1x!tpu.dma_semaphore, #tpu.memory_space<semaphore_mem>> -> memref<!tpu.dma_semaphore, #tpu.memory_space<semaphore_mem>>
      tpu.wait_dma2 semaphore(%14 : memref<!tpu.dma_semaphore, #tpu.memory_space<semaphore_mem>>) src(%10 : memref<128xf32, #tpu.memory_space<any>>) dst(%12 : memref<128xf32, #tpu.memory_space<vmem>>)
    }
    %c16_i32_5 = arith.constant 16 : i32
    %c0 = arith.constant 0 : index
    %c0_6 = arith.constant 0 : index
    %3 = vector.load %arg4[%c0, %c0_6] : memref<16x128xf32, #tpu.memory_space<vmem>>, vector<16x128xf32>
    %cst = arith.constant 11.3137083 : f32
    %4 = vector.broadcast %cst : f32 to vector<16x128xf32>
    %5 = arith.mulf %3, %4 : vector<16x128xf32>
    %c0_7 = arith.constant 0 : index
    %c0_8 = arith.constant 0 : index
    %6 = vector.load %arg3[%c0_7, %c0_8] : memref<16x128xf32, #tpu.memory_space<vmem>>, vector<16x128xf32>
    tpu.vector_store %arg3[%c0_7, %c0_8], %5 {strides = array<i32>} : memref<16x128xf32, #tpu.memory_space<vmem>>, vector<16x128xf32>,
    return
  }
  func.func @transform_1(%arg0: i32, %arg1: memref<16xi32, #tpu.memory_space<smem>>) -> (i32, i32) {
    %c0_i32 = arith.constant 0 : i32
    %c0_i32_0 = arith.constant 0 : i32
    return %arg0, %c0_i32 : i32, i32
  }
}

</mosaic_0001>

<llo_original>
// kernel: tpu_custom_call.1
$region0: #{tpu_custom_call.1}
  #allocation0 [shape = 'u32[]', space=smem, size = 0x4, offset = 0x4, fixed_abs, tag = 'smem constant byte address 0x4 - core index']
  #allocation1 [shape = 'u32[144,128]{1,0:T(1,128)}', space=vmem, size = 0x12000, scoped, tag = 'internal scratch']
  #allocation2 [shape = 'f32[16,128]{1,0:T(8,128)}', space=vmem, size = 0x2000, scoped, tag = 'scratch operand']
  #allocation3 [shape = 's32[1]{0}', space=sflag, size = 0x4, scoped, tag = 'scratch operand']
  #allocation4 [shape = 's32[1]{0}', space=sflag, size = 0x4, scoped, tag = 'scoped memory for tpu_custom_call.1']
  #allocation5 [shape = 'u8[512]{0}', space=smem, size = 0x200, scoped, tag = 'prefetched SMEM operand 0']
  #allocation8 [shape = 's32[]', space=sflag, size = 0x4, offset = 0, fixed_abs, tag = 'sflag constant byte address 0x0 - dummy sync flag']
  #allocation9 [shape = 's32[]', space=sflag, size = 0x4, offset = 0, fixed_abs, tag = 'sflag constant byte address 0x0 - dummy sync flag']
  #allocation10 [shape = 'u32[]', space=smem, size = 0x4, offset = 0x44, fixed_abs, tag = 'smem constant byte address 0x44 - assertion arg 0']
  #allocation11 [shape = 'u32[]', space=smem, size = 0x4, offset = 0x48, fixed_abs, tag = 'smem constant byte address 0x48 - assertion arg 1']
  %s0 = inlined_call_operand.hbm [shape: s32[16], index: 0, kind: input, shape index: {}]
  %s1 = inlined_call_operand.hbm [shape: f32[64,128], index: 1, kind: input, shape index: {}]
  %s2 = inlined_call_operand.hbm [shape: f32[16,128], index: 2, kind: output, shape index: {}]
  %s3 = sld [smem:[#allocation0]]
  $region28: #{tpu_custom_call.1} parent=0
    _
  %s5 = ssub.s32 1, %s3
  %s6 = scalar_select 0, %s5, %s3
  %8 = dma.hbm_to_smem %s0, 16, [#allocation5], [#allocation4]
  %9 = dma.done [#allocation4], 16
  %10 = sfence
  $region1: #{tpu_custom_call.1} parent=0
    #allocation6 [shape = 'u8[8192]{0}', space=vmem, size = 0x2000, scoped, tag = 'output window, operand 0, single buffered']
    #allocation7 [shape = 's32[1]{0}', space=sflag, size = 0x4, scoped, tag = 'scoped memory for tpu_custom_call.1']
    %11 = vsyncpa [#allocation7], 0
    %s12 = smul.u32 0, 16
    loop: start=0, step=1, limit=16
    $region2: #{tpu_custom_call.1} parent=1 // loop_pre_header
      _
    $region3: #{tpu_custom_call.1} parent=1 // loop_header
      %s14 = sphi 0, %s18
      %p15 = scmp.ge.s32.totalorder %s14, 16
    $region4: #{tpu_custom_call.1} parent=1 // loop_header_branch
      %17 = sbr.rel (%p15) target = $region8
    $region5: #{tpu_custom_call.1} parent=1 // loop_body
      %s19 = sadd.s32 %s12, %s14
      %s20 = sld [smem:[#allocation5 + %s19]]
      %s21 = smul.addr %s20, 16
      %s22 = scalar_lea.hbm %s1, %s21
      %s23 = scalar_lea.vmem [#allocation2], %s14
      // Predicated region
      $region9: #{tpu_custom_call.1} parent=5 // pred_check
        _
      $region10: #{tpu_custom_call.1} parent=5 // pred_check_branch
        %25 = sbr.rel target = $region12
      $region11: #{tpu_custom_call.1} parent=5 // pred_region
        %26 = sst [smem:[#allocation10]] [#allocation9]
        %27 = sst [smem:[#allocation11]] [#allocation8]
      $region12: #{tpu_custom_call.1} parent=5 // pred_fallthru
        _
      %29 = shalt.err (0)
      %s31 = sshll.u32 %s23, 4
      %s32 = int_to_ptr.vmem [resolvable:$true] %s31
      %34 = dma.hbm_to_vmem [thread:$0]  %s22, 16, %s32, [#allocation3]
    $region6: #{tpu_custom_call.1} parent=1 // loop_footer
      %s18 = sadd.s32 1, %s14
    $region7: #{tpu_custom_call.1} parent=1 // loop_footer_branch
      %13 = sbr.rel target = $region3
    $region8: #{tpu_custom_call.1} parent=1 // loop_exit
      _
    loop: start=0, step=1, limit=16
    $region13: #{tpu_custom_call.1} parent=1 // loop_pre_header
      _
    $region14: #{tpu_custom_call.1} parent=1 // loop_header
      %s36 = sphi 0, %s40
      %p37 = scmp.ge.s32.totalorder %s36, 16
    $region15: #{tpu_custom_call.1} parent=1 // loop_header_branch
      %39 = sbr.rel (%p37) target = $region19
    $region16: #{tpu_custom_call.1} parent=1 // loop_body
      %42 = dma.done [#allocation3], 16
    $region17: #{tpu_custom_call.1} parent=1 // loop_footer
      %s40 = sadd.s32 1, %s36
    $region18: #{tpu_custom_call.1} parent=1 // loop_footer_branch
      %35 = sbr.rel target = $region14
    $region19: #{tpu_custom_call.1} parent=1 // loop_exit
      _
    %v43 = vld [vmem:[#allocation2] sm:$0xff]
    %v44 = vld [vmem:[#allocation2 + $0x8] sm:$0xff]
    %v45 = vmul.f32 %v43, 11.313708
    %v46 = vmul.f32 %v44, 11.313708
    %47 = vst [vmem:[#allocation6] sm:$0xff] %v45
    %48 = vst [vmem:[#allocation6 + $0x8] sm:$0xff] %v46
    // Predicated region
    $region20: #{tpu_custom_call.1} parent=1 // pred_check
      _
    $region21: #{tpu_custom_call.1} parent=1 // pred_check_branch
      %50 = sbr.rel (0) target = $region23
    $region22: #{tpu_custom_call.1} parent=1 // pred_region
      %s52 = ssub.s32 256, 256
      %53 = vsyncadd [#allocation7], %s52
      %s54 = sshll.u32 [#allocation6], 4
      %s55 = int_to_ptr.vmem [resolvable:$true] %s54
      %60 = dma.vmem_to_hbm [thread:$0]  %s55, 256, %s2, [#allocation7], 128, 128, 8
    $region23: #{tpu_custom_call.1} parent=1 // pred_fallthru
      _
    // Predicated region
    $region24: #{tpu_custom_call.1} parent=1 // pred_check
      _
    $region25: #{tpu_custom_call.1} parent=1 // pred_check_branch
      %62 = sbr.rel (0) target = $region27
    $region26: #{tpu_custom_call.1} parent=1 // pred_region
      %63 = dma.done [#allocation7], 256
    $region27: #{tpu_custom_call.1} parent=1 // pred_fallthru
      _
    %64 = vsyncpa [#allocation7], 1
  %65 = vsyncmov [#allocation3]
  %s66 = vpop.sfrf %65
  %p67 = scmp.eq.s32.totalorder %s66, 0
  %p68 = pneg %p67
  %70 = shalt.err (%p68)

</llo_original>
